<compile_context>
chip_gen: v5e
topology: v5e:2x2
jax: 0.10.0
libtpu: 0.0.40
codegen_flags: <defaults>
</compile_context>

<pallas_src>
import functools
from collections import OrderedDict

import jax
import jax.numpy as jnp
import numpy as np
from jax import lax
from jax.experimental import pallas as pl
from jax.experimental.pallas import tpu as pltpu

MSE_MULTIPLIER = 0.01


# ----------------------------------------------------------------------------
# Host-side glue: replicate action_dict_to_tensor / torch.stack semantics and
# lay the targets out lane-aligned with `pred` (pure numpy, no device launch).
# ----------------------------------------------------------------------------
def action_dict_to_array(x: OrderedDict, keys, contains: bool) -> np.ndarray:
    vals = []
    for key in x.keys():
        if (contains and key in keys) or (not contains and key not in keys):
            value = x[key][0]
            if key != "camera":
                vals.append(float(value))
            else:
                vals.append(float(value[0]))
                vals.append(float(value[1]))
    return np.asarray(vals, dtype=np.float32)


def stack_targets(y):
    """-> (cat_targets [B, ncat], mse_targets [B, nc]) as numpy arrays."""
    cat = np.stack([action_dict_to_array(a, ["camera"], contains=False) for a in y])
    mse = np.stack([action_dict_to_array(a, ["camera"], contains=True) for a in y])
    return cat, mse


def build_aligned_targets(cat_np: np.ndarray, mse_np: np.ndarray) -> jnp.ndarray:
    """[mse | mse copy | cat] -> [B, 2*nc + ncat], lane-aligned with pred."""
    tgt = np.concatenate([mse_np, mse_np, cat_np], axis=1).astype(np.float32)
    return jnp.asarray(tgt)


# ----------------------------------------------------------------------------
# Pallas kernel: full loss on two same-shape [B, D] vregs, one fused reduction.
# ----------------------------------------------------------------------------
def _imitation_loss_kernel(pred_ref, tgt_ref, out_ref, *, num_continuous: int,
                           num_categorical: int, batch: int,
                           binary_targets: bool):
    nc, ncat, b = num_continuous, num_categorical, batch
    d = 2 * nc + ncat

    # Compile-time reciprocals: no runtime divides emitted.
    inv_bncat = 1.0 / (b * ncat)
    inv_b = 1.0 / b
    # torch's unbiased std divides by (b-1); b==1 yields NaN, matching torch.
    inv_bm1 = 1.0 / (b - 1) if b > 1 else float("nan")
    msc = MSE_MULTIPLIER / (b * nc)

    pred = pred_ref[...]   # [B, D] f32 — one vreg load
    tgt = tgt_ref[...]     # [B, D] f32 — one vreg load

    lane = lax.broadcasted_iota(jnp.int32, (b, d), 1)
    mask_mu = lane < nc            # continuous-mean head
    mask_cat = lane >= 2 * nc      # categorical head
    # std head = remaining lanes (nc <= lane < 2*nc)

    # --- BCELoss terms (mean reduction; torch clamps each log at -100). ---
    # Log inputs are masked off the categorical lanes so every lane stays
    # finite; the final select discards those lanes anyway.
    if binary_targets:
        # Hard 0/1 labels: single log per element (EUP) + a VALU select.
        p_sel = jnp.where(tgt > 0.5, pred, 1.0 - pred)
        p_safe = jnp.where(mask_cat, p_sel, 1.0)
        bce_terms = jnp.maximum(jnp.log(p_safe), -100.0)
    else:
        # Soft-target-safe exact nn.BCELoss form. Clamp BEFORE the multiply so
        # 0 * (-inf) never occurs.
        p_safe = jnp.where(mask_cat, pred, 0.5)
        log_p = jnp.maximum(jnp.log(p_safe), -100.0)
        log_1mp = jnp.maximum(jnp.log(1.0 - p_safe), -100.0)
        bce_terms = tgt * log_p + (1.0 - tgt) * log_1mp

    # --- Unbiased std(dim=0) of the targets, per lane.  sum(x) and sum(x^2)
    #     are two independent sublane reductions (no mean->sub->square chain);
    #     var is clamped at 0 before sqrt to guard fp cancellation. ---
    s1 = jnp.sum(tgt, axis=0, keepdims=True)          # [1, D]
    s2 = jnp.sum(tgt * tgt, axis=0, keepdims=True)    # [1, D]
    mean = s1 * inv_b
    var = jnp.maximum(s2 - float(b) * mean * mean, 0.0) * inv_bm1
    std = jnp.sqrt(var)                                # [1, D] -> bcast over B

    # --- MSE terms for both heads (finite on every lane). ---
    sq_mu = (pred - tgt) ** 2       # valid on the mu lanes
    sq_std = (pred - std) ** 2      # valid on the std lanes

    # --- Single fused reduction: pre-scale every disjoint-lane term by its
    #     compile-time constant, merge with selects, reduce ONCE. ---
    contrib = jnp.where(mask_cat, (-inv_bncat) * bce_terms,
                        msc * jnp.where(mask_mu, sq_mu, sq_std))
    out_ref[0] = jnp.sum(contrib)
    # TODO(synk): writer.add_scalars (TensorBoard side-effect logging) has no
    #             Pallas equivalent; only the combined scalar loss is returned.


def imitation_loss(pred: jnp.ndarray,
                   targets_aligned: jnp.ndarray,
                   num_continuous: int,
                   *,
                   binary_targets: bool = False) -> jnp.ndarray:
    """Scalar imitation loss.

    `targets_aligned` is the host-built [B, D] array
    [mse_targets | mse_targets | cat_targets], lane-aligned with
    `pred` = [pred_mu | pred_std | pred_cat]; no device-side packing needed.

    NOTE: batch size 1 yields NaN (torch's unbiased std divides by B-1).
    `binary_targets=True` is only valid for hard 0/1 categorical targets; use
    the default two-log path for soft/smoothed labels.
    """
    if pred.dtype != jnp.float32:
        pred = pred.astype(jnp.float32)
    if targets_aligned.dtype != jnp.float32:
        targets_aligned = targets_aligned.astype(jnp.float32)

    b, d = pred.shape
    nc = num_continuous
    ncat = d - 2 * nc
    assert targets_aligned.shape == (b, d), (targets_aligned.shape, (b, d))

    num_logs = b * ncat if binary_targets else 2 * b * ncat
    cost = pl.CostEstimate(
        flops=25 * b * d,                      # tiny; advisory for the scheduler
        transcendentals=num_logs + d,          # logs + sqrt lanes
        bytes_accessed=(2 * b * d + 1) * 4,
    )

    out = pl.pallas_call(
        functools.partial(
            _imitation_loss_kernel,
            num_continuous=nc,
            num_categorical=ncat,
            batch=b,
            binary_targets=binary_targets,
        ),
        out_shape=jax.ShapeDtypeStruct((1,), jnp.float32),
        in_specs=[pl.BlockSpec(memory_space=pltpu.MemorySpace.VMEM),
                  pl.BlockSpec(memory_space=pltpu.MemorySpace.VMEM)],
        out_specs=pl.BlockSpec(memory_space=pltpu.MemorySpace.SMEM),
        cost_estimate=cost,
    )(pred, targets_aligned)
    return out[0]


# ----------------------------------------------------------------------------
# Pure-JAX reference (exact nn.BCELoss / nn.MSELoss semantics) for checking.
# ----------------------------------------------------------------------------
def imitation_loss_ref(pred, cat_t, mse_t, nc):
    pred = pred.astype(jnp.float32)
    b = mse_t.shape[0]
    pred_mu, pred_std, pred_cat = pred[:, :nc], pred[:, nc:2 * nc], pred[:, 2 * nc:]
    log_p = jnp.maximum(jnp.log(pred_cat), -100.0)
    log_1mp = jnp.maximum(jnp.log(1.0 - pred_cat), -100.0)
    bce = -jnp.mean(cat_t * log_p + (1.0 - cat_t) * log_1mp)
    std = jnp.sqrt(jnp.sum((mse_t - jnp.mean(mse_t, axis=0)) ** 2, axis=0) / (b - 1))
    mse = jnp.mean((pred_mu - mse_t) ** 2) + jnp.mean((pred_std - std[None, :]) ** 2)
    return bce + MSE_MULTIPLIER * mse


# ----------------------------------------------------------------------------
# Main
# ----------------------------------------------------------------------------
if __name__ == "__main__":
    B = 8                 # batch of action dicts (>= 2; unbiased std needs B-1)
    NUM_CONTINUOUS = 2    # camera (pitch, yaw)
    NUM_CATEGORICAL = 10  # binary action heads
    D = 2 * NUM_CONTINUOUS + NUM_CATEGORICAL

    key = jax.random.PRNGKey(0)
    k_pred, k_cam, k_bin = jax.random.split(key, 3)

    # Synthetic action dicts (deterministic), mimicking MineRL-style actions.
    cam_np = np.asarray(10.0 * jax.random.normal(k_cam, (B, 2)), dtype=np.float32)
    bin_np = np.asarray(
        (jax.random.uniform(k_bin, (B, NUM_CATEGORICAL)) > 0.5).astype(jnp.float32))
    action_keys = [f"act{i}" for i in range(NUM_CATEGORICAL)]
    y = []
    for i in range(B):
        d = OrderedDict()
        d["camera"] = [(cam_np[i, 0], cam_np[i, 1])]
        for j, k in enumerate(action_keys):
            d[k] = [bin_np[i, j]]
        y.append(d)

    cat_np, mse_np = stack_targets(y)                         # host numpy
    targets_aligned = build_aligned_targets(cat_np, mse_np)   # [B, D] on device

    # Predictions: continuous heads arbitrary reals, categorical heads in (0,1).
    raw = jax.random.normal(k_pred, (B, D), dtype=jnp.float32)
    pred = jnp.concatenate(
        [raw[:, :2 * NUM_CONTINUOUS], jax.nn.sigmoid(raw[:, 2 * NUM_CONTINUOUS:])],
        axis=1)

    # Targets built above are hard 0/1 -> the single-log BCE path is valid.
    loss = imitation_loss(pred, targets_aligned, NUM_CONTINUOUS,
                          binary_targets=True)
    loss = jax.block_until_ready(loss)

    ref = imitation_loss_ref(pred, jnp.asarray(cat_np), jnp.asarray(mse_np),
                             NUM_CONTINUOUS)
    assert np.allclose(np.asarray(loss), np.asarray(ref), rtol=1e-5, atol=1e-5), (
        loss, ref)

    # Also check the general (soft-target-safe) two-log path.
    loss_general = jax.block_until_ready(
        imitation_loss(pred, targets_aligned, NUM_CONTINUOUS,
                       binary_targets=False))
    assert np.allclose(np.asarray(loss_general), np.asarray(ref),
                       rtol=1e-5, atol=1e-5), (loss_general, ref)

    print("KERNEL_OK")
</pallas_src>

<mosaic_0001>
module attributes {stable_mosaic.version = 11 : i64} {
  func.func @_imitation_loss_kernel(%arg0: memref<8x14xf32, #tpu.memory_space<vmem>>, %arg1: memref<8x14xf32, #tpu.memory_space<vmem>>, %arg2: memref<1xf32, #tpu.memory_space<smem>>) attributes {dimension_semantics = [], scalar_prefetch = 0 : i64, scratch_operands = 0 : i64, tpu.core_type = #tpu.core_type<tc>} {
    %c0 = arith.constant 0 : index
    %c0_0 = arith.constant 0 : index
    %0 = vector.load %arg0[%c0, %c0_0] : memref<8x14xf32, #tpu.memory_space<vmem>>, vector<8x14xf32>
    %c0_1 = arith.constant 0 : index
    %c0_2 = arith.constant 0 : index
    %1 = vector.load %arg1[%c0_1, %c0_2] : memref<8x14xf32, #tpu.memory_space<vmem>>, vector<8x14xf32>
    %2 = tpu.iota {dimensions = array<i32: 1>} : vector<8x14xi32>
    %c2_i32 = arith.constant 2 : i32
    %3 = vector.broadcast %c2_i32 : i32 to vector<8x14xi32>
    %4 = arith.cmpi slt, %2, %3 : vector<8x14xi32>
    %c4_i32 = arith.constant 4 : i32
    %5 = vector.broadcast %c4_i32 : i32 to vector<8x14xi32>
    %6 = arith.cmpi sge, %2, %5 : vector<8x14xi32>
    %cst = arith.constant 5.000000e-01 : f32
    %7 = vector.broadcast %cst : f32 to vector<8x14xf32>
    %8 = arith.cmpf ogt, %1, %7 : vector<8x14xf32>
    %cst_3 = arith.constant 1.000000e+00 : f32
    %9 = vector.broadcast %cst_3 : f32 to vector<8x14xf32>
    %10 = arith.subf %9, %0 : vector<8x14xf32>
    %11 = arith.select %8, %0, %10 : vector<8x14xi1>, vector<8x14xf32>
    %cst_4 = arith.constant 1.000000e+00 : f32
    %12 = vector.broadcast %cst_4 : f32 to vector<8x14xf32>
    %13 = arith.select %6, %11, %12 : vector<8x14xi1>, vector<8x14xf32>
    %14 = math.log %13 : vector<8x14xf32>
    %cst_5 = arith.constant -1.000000e+02 : f32
    %15 = vector.broadcast %cst_5 : f32 to vector<8x14xf32>
    %16 = arith.maximumf %14, %15 : vector<8x14xf32>
    %cst_6 = arith.constant dense<0.000000e+00> : vector<14xf32>
    %17 = vector.multi_reduction <add>, %1, %cst_6 [0] : vector<8x14xf32> to vector<14xf32>
    %18 = vector.shape_cast %17 : vector<14xf32> to vector<1x14xf32>
    %19 = arith.mulf %1, %1 : vector<8x14xf32>
    %cst_7 = arith.constant dense<0.000000e+00> : vector<14xf32>
    %20 = vector.multi_reduction <add>, %19, %cst_7 [0] : vector<8x14xf32> to vector<14xf32>
    %21 = vector.shape_cast %20 : vector<14xf32> to vector<1x14xf32>
    %cst_8 = arith.constant 1.250000e-01 : f32
    %22 = vector.broadcast %cst_8 : f32 to vector<1x14xf32>
    %23 = arith.mulf %18, %22 : vector<1x14xf32>
    %cst_9 = arith.constant 8.000000e+00 : f32
    %24 = vector.broadcast %cst_9 : f32 to vector<1x14xf32>
    %25 = arith.mulf %24, %23 : vector<1x14xf32>
    %26 = arith.mulf %25, %23 : vector<1x14xf32>
    %27 = arith.subf %21, %26 : vector<1x14xf32>
    %cst_10 = arith.constant 0.000000e+00 : f32
    %28 = vector.broadcast %cst_10 : f32 to vector<1x14xf32>
    %29 = arith.maximumf %27, %28 : vector<1x14xf32>
    %cst_11 = arith.constant 0.142857149 : f32
    %30 = vector.broadcast %cst_11 : f32 to vector<1x14xf32>
    %31 = arith.mulf %29, %30 : vector<1x14xf32>
    %32 = math.sqrt %31 : vector<1x14xf32>
    %33 = arith.subf %0, %1 : vector<8x14xf32>
    %34 = arith.mulf %33, %33 : vector<8x14xf32>
    %35 = vector.broadcast %32 : vector<1x14xf32> to vector<8x14xf32>
    %36 = arith.subf %0, %35 : vector<8x14xf32>
    %37 = arith.mulf %36, %36 : vector<8x14xf32>
    %cst_12 = arith.constant -1.250000e-02 : f32
    %38 = vector.broadcast %cst_12 : f32 to vector<8x14xf32>
    %39 = arith.mulf %38, %16 : vector<8x14xf32>
    %40 = arith.select %4, %34, %37 : vector<8x14xi1>, vector<8x14xf32>
    %cst_13 = arith.constant 6.250000e-04 : f32
    %41 = vector.broadcast %cst_13 : f32 to vector<8x14xf32>
    %42 = arith.mulf %41, %40 : vector<8x14xf32>
    %43 = arith.select %6, %39, %42 : vector<8x14xi1>, vector<8x14xf32>
    %44 = vector.shape_cast %43 : vector<8x14xf32> to vector<1x8x14xf32>
    %cst_14 = arith.constant dense<0.000000e+00> : vector<1xf32>
    %45 = vector.multi_reduction <add>, %44, %cst_14 [1, 2] : vector<1x8x14xf32> to vector<1xf32>
    %46 = vector.shape_cast %45 : vector<1xf32> to vector<1x1x1xf32>
    %47 = vector.extract %46[0, 0, 0] : f32 from vector<1x1x1xf32>
    %c0_15 = arith.constant 0 : index
    %48 = memref.load %arg2[%c0_15] : memref<1xf32, #tpu.memory_space<smem>>
    memref.store %47, %arg2[%c0_15] : memref<1xf32, #tpu.memory_space<smem>>
    return
  }
}

</mosaic_0001>

<llo_original>
// kernel: tpu_custom_call.1
$region0: #{tpu_custom_call.1}
  #allocation0 [shape = 'u32[]', space=smem, size = 0x4, offset = 0x4, fixed_abs, tag = 'smem constant byte address 0x4 - core index']
  #allocation1 [shape = 'u32[72,128]{1,0:T(1,128)}', space=vmem, size = 0x9000, scoped, tag = 'internal scratch']
  %s0 = inlined_call_operand.hbm [shape: f32[8,14], index: 0, kind: input, shape index: {}]
  %s1 = inlined_call_operand.hbm [shape: f32[8,14], index: 1, kind: input, shape index: {}]
  %s2 = inlined_call_operand.hbm [shape: f32[1], index: 2, kind: output, shape index: {}]
  %s3 = sld [smem:[#allocation0]]
  $region26: #{tpu_custom_call.1} parent=0
    _
  %s5 = ssub.s32 1, %s3
  %s6 = scalar_select 0, %s5, %s3
  $region1: #{tpu_custom_call.1} parent=0
    #allocation2 [shape = 'u8[4096]{0}', space=vmem, size = 0x1000, scoped, tag = 'input window, operand 0, single buffered']
    #allocation3 [shape = 's32[1]{0}', space=sflag, size = 0x4, scoped, tag = 'scoped memory for tpu_custom_call.1']
    #allocation4 [shape = 's32[1]{0}', space=sflag, size = 0x4, scoped, tag = 'scoped memory for tpu_custom_call.1']
    #allocation5 [shape = 'u8[4096]{0}', space=vmem, size = 0x1000, scoped, tag = 'input window, operand 1, single buffered']
    #allocation6 [shape = 's32[1]{0}', space=sflag, size = 0x4, scoped, tag = 'scoped memory for tpu_custom_call.1']
    #allocation7 [shape = 'u8[512]{0}', space=smem, size = 0x200, scoped, tag = 'output window, operand 0, single buffered']
    %7 = vsyncpa [#allocation3], 0
    %8 = vsyncpa [#allocation6], 0
    %9 = vsyncpa [#allocation4], 0
    // Predicated region
    $region2: #{tpu_custom_call.1} parent=1 // pred_check
      _
    $region3: #{tpu_custom_call.1} parent=1 // pred_check_branch
      %11 = sbr.rel (0) target = $region5
    $region4: #{tpu_custom_call.1} parent=1 // pred_region
      %13 = vsyncadd [#allocation3], 0
      %s15 = sshll.u32 %s0, 4
      %s16 = int_to_ptr.hbm [resolvable:$true] %s15
      %s17 = sshll.u32 [#allocation2], 4
      %s18 = int_to_ptr.vmem [resolvable:$true] %s17
      %20 = dma.hbm_to_vmem [thread:$0]  %s16, 128, %s18, [#allocation3]
    $region5: #{tpu_custom_call.1} parent=1 // pred_fallthru
      _
    // Predicated region
    $region6: #{tpu_custom_call.1} parent=1 // pred_check
      _
    $region7: #{tpu_custom_call.1} parent=1 // pred_check_branch
      %22 = sbr.rel (0) target = $region9
    $region8: #{tpu_custom_call.1} parent=1 // pred_region
      %24 = vsyncadd [#allocation6], 0
      %s26 = sshll.u32 %s1, 4
      %s27 = int_to_ptr.hbm [resolvable:$true] %s26
      %s28 = sshll.u32 [#allocation5], 4
      %s29 = int_to_ptr.vmem [resolvable:$true] %s28
      %31 = dma.hbm_to_vmem [thread:$0]  %s27, 128, %s29, [#allocation6]
    $region9: #{tpu_custom_call.1} parent=1 // pred_fallthru
      _
    // Predicated region
    $region10: #{tpu_custom_call.1} parent=1 // pred_check
      _
    $region11: #{tpu_custom_call.1} parent=1 // pred_check_branch
      %33 = sbr.rel (0) target = $region13
    $region12: #{tpu_custom_call.1} parent=1 // pred_region
      %35 = dma.done [#allocation3], 128
    $region13: #{tpu_custom_call.1} parent=1 // pred_fallthru
      _
    // Predicated region
    $region14: #{tpu_custom_call.1} parent=1 // pred_check
      _
    $region15: #{tpu_custom_call.1} parent=1 // pred_check_branch
      %37 = sbr.rel (0) target = $region17
    $region16: #{tpu_custom_call.1} parent=1 // pred_region
      %39 = dma.done [#allocation6], 128
    $region17: #{tpu_custom_call.1} parent=1 // pred_fallthru
      _
    %v40 = vld [vmem:[#allocation2] sm:$0xff]
    %v41 = vld [vmem:[#allocation5] sm:$0xff]
    %v42 = vlaneseq
    %v43 = vand.u32 %v42, 127
    %vm44 = vcmp.lt.s32.totalorder %v43, 2
    %vm45 = vcmp.ge.s32.totalorder %v43, 4
    %vm46 = vcmp.gt.f32.partialorder %v41, 0.5
    %v47 = vsub.f32 1.0, %v40
    %v48 = vsel %vm46, %v40, %v47
    %v49 = vsel %vm45, %v48, 1.0
    %v50 = vlog2.pop %v49
    %v51 = vmul.f32 %v50, 0.6931472
    %v52 = vmax.f32 %v51, -100.0
    %vm53 = vcmask 113664
    %v54 = vsel %vm53, %v41, 0.0
    %v55 = vrot.slane %v54, 4
    %v56 = vadd.f32 %v54, %v55
    %v57 = vrot.slane %v56, 2
    %v58 = vadd.f32 %v56, %v57
    %v59 = vrot.slane %v58, 1
    %v60 = vadd.f32 %v58, %v59
    %v61 = vmul.f32 %v41, %v41
    %v62 = vsel %vm53, %v61, 0.0
    %v63 = vrot.slane %v62, 4
    %v64 = vadd.f32 %v62, %v63
    %v65 = vrot.slane %v64, 2
    %v66 = vadd.f32 %v64, %v65
    %v67 = vrot.slane %v66, 1
    %v68 = vadd.f32 %v66, %v67
    %v69 = vmul.f32 %v60, 0.125
    %v70 = vmul.f32 %v69, 8.0
    %v71 = vmul.f32 %v70, %v69
    %v72 = vsub.f32 %v68, %v71
    %v73 = vmax.f32 %v72, 0.0
    %v74 = vmul.f32 %v73, 0.14285715
    %v75 = vrsqrt.pop %v74
    %v76 = vmul.f32 %v75, %v74
    %v77 = vmul.f32 %v76, %v75
    %v78 = vmul.f32 0.5, %v77
    %v79 = vsub.f32 1.5, %v78
    %v80 = vmul.f32 %v75, %v79
    %v81 = vmul.f32 %v74, %v80
    %vm82 = vcmp.eq.f32.partialorder %v74, inf
    %v83 = vsel %vm82, %v74, %v81
    %vm84 = vcmp.eq.f32.partialorder %v74, 0.0
    %v85 = vand.u32 %v74, 2147483648
    %v86 = vsel %vm84, %v85, %v83
    %v87 = vsub.f32 %v40, %v41
    %v88 = vmul.f32 %v87, %v87
    %v89 = vsub.f32 %v40, %v86
    %v90 = vmul.f32 %v89, %v89
    %v91 = vmul.f32 %v52, -0.0125
    %v92 = vsel %vm44, %v88, %v90
    %v93 = vmul.f32 %v92, 0.000625
    %v94 = vsel %vm45, %v91, %v93
    %v95 = vsel %vm53, %v94, 0.0
    %96 = vadd.xlane.f32.xlu0 %v95
    %v97 = vpop.xlane.xlu0 %96
    %v98 = vrot.slane %v97, 4
    %v99 = vadd.f32 %v97, %v98
    %v100 = vrot.slane %v99, 2
    %v101 = vadd.f32 %v99, %v100
    %v102 = vrot.slane %v101, 1
    %v103 = vadd.f32 %v101, %v102
    %s104 = vtos %v103
    %s105 = scalar_lea.smem [#allocation7], 0
    %106 = sst [smem:[%s105]] %s104
    // Predicated region
    $region18: #{tpu_custom_call.1} parent=1 // pred_check
      _
    $region19: #{tpu_custom_call.1} parent=1 // pred_check_branch
      %108 = sbr.rel (0) target = $region21
    $region20: #{tpu_custom_call.1} parent=1 // pred_region
      %110 = vsyncadd [#allocation4], 0
      %s112 = sshll.u32 %s2, 4
      %s113 = int_to_ptr.hbm [resolvable:$true] %s112
      %115 = dma.smem_to_hbm [#allocation7], 16, %s113, [#allocation4]
    $region21: #{tpu_custom_call.1} parent=1 // pred_fallthru
      _
    // Predicated region
    $region22: #{tpu_custom_call.1} parent=1 // pred_check
      _
    $region23: #{tpu_custom_call.1} parent=1 // pred_check_branch
      %117 = sbr.rel (0) target = $region25
    $region24: #{tpu_custom_call.1} parent=1 // pred_region
      %119 = dma.done [#allocation4], 16
    $region25: #{tpu_custom_call.1} parent=1 // pred_fallthru
      _
    %120 = sfence
    %121 = vsyncpa [#allocation3], 1
    %122 = vsyncpa [#allocation6], 1
    %123 = vsyncpa [#allocation4], 1

</llo_original>
